<compile_context>
chip_gen: v5e
topology: v5e:2x2
jax: 0.10.0
libtpu: 0.0.40
codegen_flags: <defaults>
</compile_context>

<pallas_src>
import functools

import jax
import jax.numpy as jnp
from jax.experimental import pallas as pl
from jax.experimental.pallas import tpu as pltpu


def _round_up(x, m):
    return ((x + m - 1) // m) * m


def _largest_divisor_leq(n, cap):
    cap = max(1, min(n, cap))
    for d in range(cap, 0, -1):
        if n % d == 0:
            return d
    return 1


def _vmem_capacity_bytes():
    try:
        info = pltpu.get_tpu_info()
        cap = getattr(info, "vmem_capacity_bytes", None)
        if cap:
            return int(cap)
    except Exception:
        pass
    return 64 * 1024 * 1024  # conservative fallback: v7x per-TensorCore VMEM


def _kl_div_kernel(p_ref, t_ref, o_ref, acc_ref, *,
                   n_valid_cols, tile_cols, n_inner, n_outer):
    o = pl.program_id(1)   # parallel spatial-chunk axis
    j = pl.program_id(2)   # reduction (inner lane-tile) axis

    # Reset the lane-wise accumulator at the start of each (batch, chunk).
    @pl.when(j == 0)
    def _():
        acc_ref[...] = jnp.zeros_like(acc_ref)

    p = p_ref[...].astype(jnp.float32)   # (B_blk, C, tile_cols)
    t = t_ref[...].astype(jnp.float32)

    # Shifted logits / log-sum-exp along the channel (sublane) axis.
    p_shift = p - jnp.max(p, axis=1, keepdims=True)
    p_lse = jnp.log(jnp.sum(jnp.exp(p_shift), axis=1))        # (B_blk, tile)

    t_shift = t - jnp.max(t, axis=1, keepdims=True)
    t_exp = jnp.exp(t_shift)
    t_sum = jnp.sum(t_exp, axis=1)                             # (B_blk, tile)

    # Per-column KL contribution (summed over channels), algebraically reduced:
    #   sum_c sm(t)_c*(log sm(t)_c - log sm(p)_c)
    #     = [sum_c exp(t_shift)_c*(t_shift_c - p_shift_c)] / t_sum
    #       + p_lse - log(t_sum)
    weighted = jnp.sum(t_exp * (t_shift - p_shift), axis=1)    # (B_blk, tile)
    kl_col = (weighted * pl.reciprocal(t_sum, approx=False)
              + (p_lse - jnp.log(t_sum)))                      # (B_blk, tile)

    ragged = (n_valid_cols % tile_cols) != 0
    if ragged:
        # Only the very last lane tile has out-of-range (garbage) columns.
        last_lin = n_outer * n_inner - 1
        is_last = (o * n_inner + j) == last_lin

        @pl.when(is_last)
        def _():
            col = (last_lin * tile_cols
                   + jax.lax.broadcasted_iota(jnp.int32, kl_col.shape, 1))
            # Keep as a select: padded columns may hold inf/NaN.
            acc_ref[...] += jnp.where(col < n_valid_cols, kl_col, 0.0)

        @pl.when(jnp.logical_not(is_last))
        def _():
            acc_ref[...] += kl_col
    else:
        acc_ref[...] += kl_col

    # Single cross-lane reduce per (batch block, spatial chunk).
    @pl.when(j == pl.num_programs(2) - 1)
    def _():
        o_ref[...] = jnp.sum(acc_ref[...], axis=1, keepdims=True)  # (B_blk, 1)


def kl_div_loss(predict, target, *, reduction="mean"):
    """predict, target: NCHW arrays (same shape). Returns scalar f32 loss
    matching torch.nn.KLDivLoss(reduction='mean') applied to
    (log_softmax(predict, dim=1), softmax(target, dim=1))."""
    assert predict.shape == target.shape
    assert reduction == "mean"
    N, C, H, W = predict.shape
    L = H * W
    total_elems = N * C * H * W

    # Free (contiguous) reshape: softmax axis C on sublanes, spatial on lanes.
    p3 = predict.reshape(N, C, L)
    t3 = target.reshape(N, C, L)

    itemsize = jnp.dtype(predict.dtype).itemsize
    sub_tile = 8 * max(1, 4 // itemsize)          # 8 (f32), 16 (bf16), 32 (i8)
    C_pad = _round_up(C, sub_tile)

    capacity = _vmem_capacity_bytes()
    # Working-set target: ~60% of physical VMEM, clipped to [24, 80] MiB.
    target_total = int(min(max(0.6 * capacity, 24 << 20), 80 << 20))

    # Padded per-lane footprint at B_blk == 1:
    #   2 inputs x 2 pipeline buffers + ~5 f32 block temps + 8-row-padded acc.
    n_temps = 5
    bytes_per_lane = (4 * C_pad * itemsize) + (n_temps * C_pad * 4) + (8 * 4)
    max_cols = max(128, (target_total // bytes_per_lane // 128) * 128)

    if L <= max_cols:
        # One lane tile covers the image: pack several images per grid step to
        # amortize the ~0.35 us per-step overhead.
        tile_L = L
        n_outer, n_inner = 1, 1
        L_pad = _round_up(L, 128)
        per_image = ((4 * itemsize + n_temps * 4) * C_pad + 4) * L_pad
        b_budget = max(1, target_total // per_image)
        B_blk = _largest_divisor_leq(N, min(8, b_budget))
    else:
        tile_L = max_cols
        B_blk = 1
        n_tiles = pl.cdiv(L, tile_L)
        # Second parallel grid axis so both v7x TensorCores stay busy even when
        # N is 1 / odd; harmless on v5e/v6e (single TC).
        n_outer = 2 if (n_tiles % 2 == 0) else 1
        n_inner = n_tiles // n_outer

    N_blocks = N // B_blk

    # Scoped-VMEM estimate with padded shapes, plus headroom, clipped to the
    # chip generation's physical VMEM (48 MiB cap on v7x, 96 MiB on v5e/v6e).
    L_pad = _round_up(tile_L, 128)
    in_block = B_blk * C_pad * L_pad * itemsize
    est = (2 * 2 * in_block
           + n_temps * B_blk * C_pad * L_pad * 4
           + _round_up(B_blk, 8) * L_pad * 4)
    vmem_limit = int(min(max(est * 1.5 + (4 << 20), 32 << 20), 0.75 * capacity))

    kernel = functools.partial(_kl_div_kernel, n_valid_cols=L, tile_cols=tile_L,
                               n_inner=n_inner, n_outer=n_outer)

    cost = pl.CostEstimate(
        flops=8 * N * C * L,
        transcendentals=2 * N * C * L + 2 * N * L,
        bytes_accessed=2 * N * C * L * itemsize + N * n_outer * 4,
    )

    partial_sums = pl.pallas_call(
        kernel,
        out_shape=jax.ShapeDtypeStruct((N, n_outer), jnp.float32),
        grid_spec=pltpu.PrefetchScalarGridSpec(
            num_scalar_prefetch=0,
            grid=(N_blocks, n_outer, n_inner),
            in_specs=[
                pl.BlockSpec((B_blk, C, tile_L),
                             lambda i, o, j: (i, 0, o * n_inner + j)),
                pl.BlockSpec((B_blk, C, tile_L),
                             lambda i, o, j: (i, 0, o * n_inner + j)),
            ],
            out_specs=pl.BlockSpec((B_blk, 1), lambda i, o, j: (i, o)),
            scratch_shapes=[pltpu.VMEM((B_blk, tile_L), jnp.float32)],
        ),
        compiler_params=pltpu.CompilerParams(
            dimension_semantics=("parallel", "parallel", "arbitrary"),
            vmem_limit_bytes=vmem_limit,
        ),
        cost_estimate=cost,
    )(p3, t3)

    # 'mean' reduction: tiny (N, n_outer) sum + divide done in the wrapper.
    # NOTE: torch 'mean' divides by N*C*H*W (this is NOT 'batchmean').
    return jnp.sum(partial_sums) / jnp.float32(total_elems)


def _kl_div_loss_ref(predict, target):
    # Pure-JAX reference of the PyTorch module semantics.
    log_p = jax.nn.log_softmax(predict.astype(jnp.float32), axis=1)
    t = jax.nn.softmax(target.astype(jnp.float32), axis=1)
    log_t = jax.nn.log_softmax(target.astype(jnp.float32), axis=1)
    return jnp.mean(t * (log_t - log_p))


if __name__ == "__main__":
    key = jax.random.PRNGKey(0)
    k1, k2 = jax.random.split(key)
    shape = (2, 4, 16, 16)  # N, C, H, W
    predict = jax.random.normal(k1, shape, dtype=jnp.float32)
    target = jax.random.normal(k2, shape, dtype=jnp.float32)

    loss = jax.block_until_ready(kl_div_loss(predict, target))
    ref = jax.block_until_ready(_kl_div_loss_ref(predict, target))
    assert jnp.allclose(loss, ref, rtol=1e-5, atol=1e-6), (loss, ref)

    print("KERNEL_OK")
</pallas_src>

<mosaic_0001>
module attributes {stable_mosaic.version = 11 : i64} {
  func.func @_kl_div_kernel(%arg0: i32, %arg1: i32, %arg2: i32, %arg3: memref<2x4x256xf32, #tpu.memory_space<vmem>>, %arg4: memref<2x4x256xf32, #tpu.memory_space<vmem>>, %arg5: memref<2x1xf32, #tpu.memory_space<vmem>>, %arg6: memref<2x256xf32, #tpu.memory_space<vmem>>) attributes {dimension_semantics = [#tpu.dimension_semantics<parallel>, #tpu.dimension_semantics<parallel>, #tpu.dimension_semantics<arbitrary>], iteration_bounds = array<i64: 1, 1, 1>, scalar_prefetch = 0 : i64, scratch_operands = 1 : i64, tpu.core_type = #tpu.core_type<tc>, window_params = [{transform_indices = @transform_0, window_bounds = array<i64: 2, 4, 256>}, {transform_indices = @transform_1, window_bounds = array<i64: 2, 4, 256>}, {transform_indices = @transform_2, window_bounds = array<i64: 2, 1>}]} {
    %c0_i32 = arith.constant 0 : i32
    %0 = arith.cmpi eq, %arg2, %c0_i32 : i32
    %1 = arith.extui %0 : i1 to i32
    %c0_i32_0 = arith.constant 0 : i32
    %2 = arith.cmpi ne, %1, %c0_i32_0 : i32
    scf.if %2 {
      %cst_16 = arith.constant 0.000000e+00 : f32
      %32 = vector.broadcast %cst_16 : f32 to vector<2x256xf32>
      %c0_17 = arith.constant 0 : index
      %c0_18 = arith.constant 0 : index
      %33 = vector.load %arg6[%c0_17, %c0_18] : memref<2x256xf32, #tpu.memory_space<vmem>>, vector<2x256xf32>
      tpu.vector_store %arg6[%c0_17, %c0_18], %32 {strides = array<i32>} : memref<2x256xf32, #tpu.memory_space<vmem>>, vector<2x256xf32>,
    } else {
    }
    %c0 = arith.constant 0 : index
    %c0_1 = arith.constant 0 : index
    %c0_2 = arith.constant 0 : index
    %3 = vector.load %arg3[%c0, %c0_1, %c0_2] : memref<2x4x256xf32, #tpu.memory_space<vmem>>, vector<2x4x256xf32>
    %c0_3 = arith.constant 0 : index
    %c0_4 = arith.constant 0 : index
    %c0_5 = arith.constant 0 : index
    %4 = vector.load %arg4[%c0_3, %c0_4, %c0_5] : memref<2x4x256xf32, #tpu.memory_space<vmem>>, vector<2x4x256xf32>
    %cst = arith.constant dense<0xFF800000> : vector<2x256xf32>
    %5 = vector.multi_reduction <maximumf>, %3, %cst [1] : vector<2x4x256xf32> to vector<2x256xf32>
    %6 = vector.shape_cast %5 : vector<2x256xf32> to vector<2x1x256xf32>
    %7 = vector.broadcast %6 : vector<2x1x256xf32> to vector<2x4x256xf32>
    %8 = arith.subf %3, %7 : vector<2x4x256xf32>
    %9 = math.exp %8 : vector<2x4x256xf32>
    %cst_6 = arith.constant dense<0.000000e+00> : vector<2x256xf32>
    %10 = vector.multi_reduction <add>, %9, %cst_6 [1] : vector<2x4x256xf32> to vector<2x256xf32>
    %11 = math.log %10 : vector<2x256xf32>
    %cst_7 = arith.constant dense<0xFF800000> : vector<2x256xf32>
    %12 = vector.multi_reduction <maximumf>, %4, %cst_7 [1] : vector<2x4x256xf32> to vector<2x256xf32>
    %13 = vector.shape_cast %12 : vector<2x256xf32> to vector<2x1x256xf32>
    %14 = vector.broadcast %13 : vector<2x1x256xf32> to vector<2x4x256xf32>
    %15 = arith.subf %4, %14 : vector<2x4x256xf32>
    %16 = math.exp %15 : vector<2x4x256xf32>
    %cst_8 = arith.constant dense<0.000000e+00> : vector<2x256xf32>
    %17 = vector.multi_reduction <add>, %16, %cst_8 [1] : vector<2x4x256xf32> to vector<2x256xf32>
    %18 = arith.subf %15, %8 : vector<2x4x256xf32>
    %19 = arith.mulf %16, %18 : vector<2x4x256xf32>
    %cst_9 = arith.constant dense<0.000000e+00> : vector<2x256xf32>
    %20 = vector.multi_reduction <add>, %19, %cst_9 [1] : vector<2x4x256xf32> to vector<2x256xf32>
    %21 = tpu.reciprocal %17 : vector<2x256xf32> -> vector<2x256xf32>
    %22 = arith.mulf %20, %21 : vector<2x256xf32>
    %23 = math.log %17 : vector<2x256xf32>
    %24 = arith.subf %11, %23 : vector<2x256xf32>
    %25 = arith.addf %22, %24 : vector<2x256xf32>
    %c0_10 = arith.constant 0 : index
    %c0_11 = arith.constant 0 : index
    %26 = vector.load %arg6[%c0_10, %c0_11] : memref<2x256xf32, #tpu.memory_space<vmem>>, vector<2x256xf32>
    %27 = arith.addf %26, %25 : vector<2x256xf32>
    %c0_12 = arith.constant 0 : index
    %c0_13 = arith.constant 0 : index
    %28 = vector.load %arg6[%c0_12, %c0_13] : memref<2x256xf32, #tpu.memory_space<vmem>>, vector<2x256xf32>
    tpu.vector_store %arg6[%c0_12, %c0_13], %27 {strides = array<i32>} : memref<2x256xf32, #tpu.memory_space<vmem>>, vector<2x256xf32>,
    %c0_i32_14 = arith.constant 0 : i32
    %29 = arith.cmpi eq, %arg2, %c0_i32_14 : i32
    %30 = arith.extui %29 : i1 to i32
    %c0_i32_15 = arith.constant 0 : i32
    %31 = arith.cmpi ne, %30, %c0_i32_15 : i32
    scf.if %31 {
      %c0_16 = arith.constant 0 : index
      %c0_17 = arith.constant 0 : index
      %32 = vector.load %arg6[%c0_16, %c0_17] : memref<2x256xf32, #tpu.memory_space<vmem>>, vector<2x256xf32>
      %cst_18 = arith.constant dense<0.000000e+00> : vector<2xf32>
      %33 = vector.multi_reduction <add>, %32, %cst_18 [1] : vector<2x256xf32> to vector<2xf32>
      %34 = vector.shape_cast %33 : vector<2xf32> to vector<2x1xf32>
      %c0_19 = arith.constant 0 : index
      %c0_20 = arith.constant 0 : index
      %35 = vector.load %arg5[%c0_19, %c0_20] : memref<2x1xf32, #tpu.memory_space<vmem>>, vector<2x1xf32>
      tpu.vector_store %arg5[%c0_19, %c0_20], %34 {strides = array<i32>} : memref<2x1xf32, #tpu.memory_space<vmem>>, vector<2x1xf32>,
    } else {
    }
    return
  }
  func.func @transform_0(%arg0: i32, %arg1: i32, %arg2: i32) -> (i32, i32, i32) {
    %c1_i32 = arith.constant 1 : i32
    %0 = arith.muli %arg1, %c1_i32 : i32
    %1 = arith.addi %0, %arg2 : i32
    %c0_i32 = arith.constant 0 : i32
    %c0_i32_0 = arith.constant 0 : i32
    return %arg0, %c0_i32, %1 : i32, i32, i32
  }
  func.func @transform_1(%arg0: i32, %arg1: i32, %arg2: i32) -> (i32, i32, i32) {
    %c1_i32 = arith.constant 1 : i32
    %0 = arith.muli %arg1, %c1_i32 : i32
    %1 = arith.addi %0, %arg2 : i32
    %c0_i32 = arith.constant 0 : i32
    %c0_i32_0 = arith.constant 0 : i32
    return %arg0, %c0_i32, %1 : i32, i32, i32
  }
  func.func @transform_2(%arg0: i32, %arg1: i32, %arg2: i32) -> (i32, i32) {
    %c0_i32 = arith.constant 0 : i32
    return %arg0, %arg1 : i32, i32
  }
}

</mosaic_0001>

<llo_original>
// kernel: tpu_custom_call.1
$region0: #{tpu_custom_call.1}
  #allocation0 [shape = 'u32[]', space=smem, size = 0x4, offset = 0x4, fixed_abs, tag = 'smem constant byte address 0x4 - core index']
  #allocation1 [shape = 'u32[72,128]{1,0:T(1,128)}', space=vmem, size = 0x9000, scoped, tag = 'internal scratch']
  #allocation2 [shape = 'f32[2,256]{1,0:T(2,128)}', space=vmem, size = 0x800, scoped, tag = 'scratch operand']
  %s0 = inlined_call_operand.hbm [shape: f32[2,4,256], index: 0, kind: input, shape index: {}]
  %s1 = inlined_call_operand.hbm [shape: f32[2,4,256], index: 1, kind: input, shape index: {}]
  %s2 = inlined_call_operand.vmem [shape: f32[2,1], index: 2, kind: output, shape index: {}]
  %s3 = sld [smem:[#allocation0]]
  $region34: #{tpu_custom_call.1} parent=0
    _
  %s5 = ssub.s32 1, %s3
  %s6 = scalar_select 0, %s5, %s3
  $region1: #{tpu_custom_call.1} parent=0
    #allocation3 [shape = 'u8[8192]{0}', space=vmem, size = 0x2000, scoped, tag = 'input window, operand 0, single buffered']
    #allocation4 [shape = 's32[1]{0}', space=sflag, size = 0x4, scoped, tag = 'scoped memory for tpu_custom_call.1']
    #allocation5 [shape = 'u8[8192]{0}', space=vmem, size = 0x2000, scoped, tag = 'input window, operand 1, single buffered']
    #allocation6 [shape = 's32[1]{0}', space=sflag, size = 0x4, scoped, tag = 'scoped memory for tpu_custom_call.1']
    %7 = vsyncpa [#allocation4], 0
    %8 = vsyncpa [#allocation6], 0
    // Predicated region
    $region2: #{tpu_custom_call.1} parent=1 // pred_check
      _
    $region3: #{tpu_custom_call.1} parent=1 // pred_check_branch
      %10 = sbr.rel (0) target = $region5
    $region4: #{tpu_custom_call.1} parent=1 // pred_region
      %s11 = sadd.s32 0, 0
      %s12 = smul.u32 2, %s11
      %14 = vsyncadd [#allocation4], 0
      %s15 = smul.addr %s12, 4
      %s16 = scalar_lea.hbm %s0, %s15
      %s17 = sshll.u32 %s16, 4
      %s18 = int_to_ptr.hbm [resolvable:$true] %s17
      %s19 = sshll.u32 [#allocation3], 4
      %s20 = int_to_ptr.vmem [resolvable:$true] %s19
      %25 = dma.hbm_to_vmem [thread:$0]  %s18, 256, %s20, [#allocation4], 128, 128, 8
    $region5: #{tpu_custom_call.1} parent=1 // pred_fallthru
      _
    // Predicated region
    $region6: #{tpu_custom_call.1} parent=1 // pred_check
      _
    $region7: #{tpu_custom_call.1} parent=1 // pred_check_branch
      %27 = sbr.rel (0) target = $region9
    $region8: #{tpu_custom_call.1} parent=1 // pred_region
      %s28 = sadd.s32 0, 0
      %s29 = smul.u32 2, %s28
      %31 = vsyncadd [#allocation6], 0
      %s32 = smul.addr %s29, 4
      %s33 = scalar_lea.hbm %s1, %s32
      %s34 = sshll.u32 %s33, 4
      %s35 = int_to_ptr.hbm [resolvable:$true] %s34
      %s36 = sshll.u32 [#allocation5], 4
      %s37 = int_to_ptr.vmem [resolvable:$true] %s36
      %42 = dma.hbm_to_vmem [thread:$0]  %s35, 256, %s37, [#allocation6], 128, 128, 8
    $region9: #{tpu_custom_call.1} parent=1 // pred_fallthru
      _
    // Predicated region
    $region10: #{tpu_custom_call.1} parent=1 // pred_check
      _
    $region11: #{tpu_custom_call.1} parent=1 // pred_check_branch
      %44 = sbr.rel (0) target = $region13
    $region12: #{tpu_custom_call.1} parent=1 // pred_region
      %46 = dma.done [#allocation4], 256
    $region13: #{tpu_custom_call.1} parent=1 // pred_fallthru
      _
    // Predicated region
    $region14: #{tpu_custom_call.1} parent=1 // pred_check
      _
    $region15: #{tpu_custom_call.1} parent=1 // pred_check_branch
      %48 = sbr.rel (0) target = $region17
    $region16: #{tpu_custom_call.1} parent=1 // pred_region
      %50 = dma.done [#allocation6], 256
    $region17: #{tpu_custom_call.1} parent=1 // pred_fallthru
      _
    %s51 = sadd.s32 0, 0
    %s52 = smul.u32 2, %s51
    %s53 = sadd.s32 0, 0
    %s54 = smul.u32 2, %s53
    %p55 = scmp.eq.s32.totalorder 0, 0
    // Predicated region
    $region18: #{tpu_custom_call.1} parent=1 // pred_check
      %p56 = pneg %p55
    $region19: #{tpu_custom_call.1} parent=1 // pred_check_branch
      %58 = sbr.rel (%p56) target = $region21
    $region20: #{tpu_custom_call.1} parent=1 // pred_region
      %59 = vst [vmem:[#allocation2] sm:$0xf] 0.0
    $region21: #{tpu_custom_call.1} parent=1 // pred_fallthru
      _
    %v60 = vld [vmem:[#allocation3] sm:$0xff]
    %v61 = vld [vmem:[#allocation3 + $0x8] sm:$0xff]
    %v62 = vld [vmem:[#allocation5] sm:$0xff]
    %v63 = vld [vmem:[#allocation5 + $0x8] sm:$0xff]
    %66 = vst [vmem:[#allocation1] ss:$2 sm:$0xff] %v60
    %v67 = vld.sshfl [vmem:[#allocation1] sm:$0xff pattern:$0x75316420]
    %v68 = vld.sshfl [vmem:[#allocation1 + $0x8] sm:$0xff pattern:$0x75316420]
    %s69 = scalar_lea.vmem [#allocation1], 16
    %70 = vst [vmem:[%s69] ss:$2 sm:$0xff] %v61
    %v71 = vld.sshfl [vmem:[#allocation1 + $0x10] sm:$0xff pattern:$0x75316420]
    %v72 = vld.sshfl [vmem:[#allocation1 + $0x18] sm:$0xff pattern:$0x75316420]
    %vm77 = vcmask 1043456
    %v78 = vsel %vm77, %v67, -inf
    %v79 = vrot.slane %v78, 4
    %v80 = vmax.f32 %v78, %v79
    %v81 = vrot.slane %v80, 2
    %v82 = vmax.f32 %v80, %v81
    %v83 = vrot.slane %v82, 1
    %v84 = vmax.f32 %v82, %v83
    %v85 = vsel %vm77, %v68, -inf
    %v86 = vrot.slane %v85, 4
    %v87 = vmax.f32 %v85, %v86
    %v88 = vrot.slane %v87, 2
    %v89 = vmax.f32 %v87, %v88
    %v90 = vrot.slane %v89, 1
    %v91 = vmax.f32 %v89, %v90
    %v92 = vsel %vm77, %v71, -inf
    %v93 = vrot.slane %v92, 4
    %v94 = vmax.f32 %v92, %v93
    %v95 = vrot.slane %v94, 2
    %v96 = vmax.f32 %v94, %v95
    %v97 = vrot.slane %v96, 1
    %v98 = vmax.f32 %v96, %v97
    %v99 = vsel %vm77, %v72, -inf
    %v100 = vrot.slane %v99, 4
    %v101 = vmax.f32 %v99, %v100
    %v102 = vrot.slane %v101, 2
    %v103 = vmax.f32 %v101, %v102
    %v104 = vrot.slane %v103, 1
    %v105 = vmax.f32 %v103, %v104
    %v110 = vrot.slane %v91, 4
    %v111 = vrot.slane %v105, 4
    %v112 = vsel %vm77, %v84, %v110
    %v113 = vsel %vm77, %v98, %v111
    %v116 = vsub.f32 %v60, %v112
    %v117 = vsub.f32 %v61, %v113
    %v118 = vmul.f32 %v116, 1.442695
    %v119 = vpow.pop %v118
    %v120 = vmul.f32 %v117, 1.442695
    %v121 = vpow.pop %v120
    %124 = vst [vmem:[#allocation1] ss:$2 sm:$0xff] %v119
    %v125 = vld.sshfl [vmem:[#allocation1] sm:$0xff pattern:$0x75316420]
    %v126 = vld.sshfl [vmem:[#allocation1 + $0x8] sm:$0xff pattern:$0x75316420]
    %s127 = scalar_lea.vmem [#allocation1], 16
    %128 = vst [vmem:[%s127] ss:$2 sm:$0xff] %v121
    %v129 = vld.sshfl [vmem:[#allocation1 + $0x10] sm:$0xff pattern:$0x75316420]
    %v130 = vld.sshfl [vmem:[#allocation1 + $0x18] sm:$0xff pattern:$0x75316420]
    %v135 = vsel %vm77, %v125, 0.0
    %v136 = vrot.slane %v135, 4
    %v137 = vadd.f32 %v135, %v136
    %v138 = vrot.slane %v137, 2
    %v139 = vadd.f32 %v137, %v138
    %v140 = vrot.slane %v139, 1
    %v141 = vadd.f32 %v139, %v140
    %v142 = vsel %vm77, %v126, 0.0
    %v143 = vrot.slane %v142, 4
    %v144 = vadd.f32 %v142, %v143
    %v145 = vrot.slane %v144, 2
    %v146 = vadd.f32 %v144, %v145
    %v147 = vrot.slane %v146, 1
    %v148 = vadd.f32 %v146, %v147
    %v149 = vsel %vm77, %v129, 0.0
    %v150 = vrot.slane %v149, 4
    %v151 = vadd.f32 %v149, %v150
    %v152 = vrot.slane %v151, 2
    %v153 = vadd.f32 %v151, %v152
    %v154 = vrot.slane %v153, 1
    %v155 = vadd.f32 %v153, %v154
    %v156 = vsel %vm77, %v130, 0.0
    %v157 = vrot.slane %v156, 4
    %v158 = vadd.f32 %v156, %v157
    %v159 = vrot.slane %v158, 2
    %v160 = vadd.f32 %v158, %v159
    %v161 = vrot.slane %v160, 1
    %v162 = vadd.f32 %v160, %v161
    %v163 = vlog2.pop %v141
    %v164 = vmul.f32 %v163, 0.6931472
    %v165 = vlog2.pop %v148
    %v166 = vmul.f32 %v165, 0.6931472
    %v167 = vlog2.pop %v155
    %v168 = vmul.f32 %v167, 0.6931472
    %v169 = vlog2.pop %v162
    %v170 = vmul.f32 %v169, 0.6931472
    %173 = vst [vmem:[#allocation1] ss:$2 sm:$0xff] %v62
    %v174 = vld.sshfl [vmem:[#allocation1] sm:$0xff pattern:$0x75316420]
    %v175 = vld.sshfl [vmem:[#allocation1 + $0x8] sm:$0xff pattern:$0x75316420]
    %s176 = scalar_lea.vmem [#allocation1], 16
    %177 = vst [vmem:[%s176] ss:$2 sm:$0xff] %v63
    %v178 = vld.sshfl [vmem:[#allocation1 + $0x10] sm:$0xff pattern:$0x75316420]
    %v179 = vld.sshfl [vmem:[#allocation1 + $0x18] sm:$0xff pattern:$0x75316420]
    %v184 = vsel %vm77, %v174, -inf
    %v185 = vrot.slane %v184, 4
    %v186 = vmax.f32 %v184, %v185
    %v187 = vrot.slane %v186, 2
    %v188 = vmax.f32 %v186, %v187
    %v189 = vrot.slane %v188, 1
    %v190 = vmax.f32 %v188, %v189
    %v191 = vsel %vm77, %v175, -inf
    %v192 = vrot.slane %v191, 4
    %v193 = vmax.f32 %v191, %v192
    %v194 = vrot.slane %v193, 2
    %v195 = vmax.f32 %v193, %v194
    %v196 = vrot.slane %v195, 1
    %v197 = vmax.f32 %v195, %v196
    %v198 = vsel %vm77, %v178, -inf
    %v199 = vrot.slane %v198, 4
    %v200 = vmax.f32 %v198, %v199
    %v201 = vrot.slane %v200, 2
    %v202 = vmax.f32 %v200, %v201
    %v203 = vrot.slane %v202, 1
    %v204 = vmax.f32 %v202, %v203
    %v205 = vsel %vm77, %v179, -inf
    %v206 = vrot.slane %v205, 4
    %v207 = vmax.f32 %v205, %v206
    %v208 = vrot.slane %v207, 2
    %v209 = vmax.f32 %v207, %v208
    %v210 = vrot.slane %v209, 1
    %v211 = vmax.f32 %v209, %v210
    %v216 = vrot.slane %v197, 4
    %v217 = vrot.slane %v211, 4
    %v218 = vsel %vm77, %v190, %v216
    %v219 = vsel %vm77, %v204, %v217
    %v222 = vsub.f32 %v62, %v218
    %v223 = vsub.f32 %v63, %v219
    %v224 = vmul.f32 %v222, 1.442695
    %v225 = vpow.pop %v224
    %v226 = vmul.f32 %v223, 1.442695
    %v227 = vpow.pop %v226
    %230 = vst [vmem:[#allocation1] ss:$2 sm:$0xff] %v225
    %v231 = vld.sshfl [vmem:[#allocation1] sm:$0xff pattern:$0x75316420]
    %v232 = vld.sshfl [vmem:[#allocation1 + $0x8] sm:$0xff pattern:$0x75316420]
    %s233 = scalar_lea.vmem [#allocation1], 16
    %234 = vst [vmem:[%s233] ss:$2 sm:$0xff] %v227
    %v235 = vld.sshfl [vmem:[#allocation1 + $0x10] sm:$0xff pattern:$0x75316420]
    %v236 = vld.sshfl [vmem:[#allocation1 + $0x18] sm:$0xff pattern:$0x75316420]
    %v241 = vsel %vm77, %v231, 0.0
    %v242 = vrot.slane %v241, 4
    %v243 = vadd.f32 %v241, %v242
    %v244 = vrot.slane %v243, 2
    %v245 = vadd.f32 %v243, %v244
    %v246 = vrot.slane %v245, 1
    %v247 = vadd.f32 %v245, %v246
    %v248 = vsel %vm77, %v232, 0.0
    %v249 = vrot.slane %v248, 4
    %v250 = vadd.f32 %v248, %v249
    %v251 = vrot.slane %v250, 2
    %v252 = vadd.f32 %v250, %v251
    %v253 = vrot.slane %v252, 1
    %v254 = vadd.f32 %v252, %v253
    %v255 = vsel %vm77, %v235, 0.0
    %v256 = vrot.slane %v255, 4
    %v257 = vadd.f32 %v255, %v256
    %v258 = vrot.slane %v257, 2
    %v259 = vadd.f32 %v257, %v258
    %v260 = vrot.slane %v259, 1
    %v261 = vadd.f32 %v259, %v260
    %v262 = vsel %vm77, %v236, 0.0
    %v263 = vrot.slane %v262, 4
    %v264 = vadd.f32 %v262, %v263
    %v265 = vrot.slane %v264, 2
    %v266 = vadd.f32 %v264, %v265
    %v267 = vrot.slane %v266, 1
    %v268 = vadd.f32 %v266, %v267
    %v269 = vsub.f32 %v222, %v116
    %v270 = vsub.f32 %v223, %v117
    %v271 = vmul.f32 %v225, %v269
    %v272 = vmul.f32 %v227, %v270
    %275 = vst [vmem:[#allocation1] ss:$2 sm:$0xff] %v271
    %v276 = vld.sshfl [vmem:[#allocation1] sm:$0xff pattern:$0x75316420]
    %v277 = vld.sshfl [vmem:[#allocation1 + $0x8] sm:$0xff pattern:$0x75316420]
    %s278 = scalar_lea.vmem [#allocation1], 16
    %279 = vst [vmem:[%s278] ss:$2 sm:$0xff] %v272
    %v280 = vld.sshfl [vmem:[#allocation1 + $0x10] sm:$0xff pattern:$0x75316420]
    %v281 = vld.sshfl [vmem:[#allocation1 + $0x18] sm:$0xff pattern:$0x75316420]
    %v286 = vsel %vm77, %v276, 0.0
    %v287 = vrot.slane %v286, 4
    %v288 = vadd.f32 %v286, %v287
    %v289 = vrot.slane %v288, 2
    %v290 = vadd.f32 %v288, %v289
    %v291 = vrot.slane %v290, 1
    %v292 = vadd.f32 %v290, %v291
    %v293 = vsel %vm77, %v277, 0.0
    %v294 = vrot.slane %v293, 4
    %v295 = vadd.f32 %v293, %v294
    %v296 = vrot.slane %v295, 2
    %v297 = vadd.f32 %v295, %v296
    %v298 = vrot.slane %v297, 1
    %v299 = vadd.f32 %v297, %v298
    %v300 = vsel %vm77, %v280, 0.0
    %v301 = vrot.slane %v300, 4
    %v302 = vadd.f32 %v300, %v301
    %v303 = vrot.slane %v302, 2
    %v304 = vadd.f32 %v302, %v303
    %v305 = vrot.slane %v304, 1
    %v306 = vadd.f32 %v304, %v305
    %v307 = vsel %vm77, %v281, 0.0
    %v308 = vrot.slane %v307, 4
    %v309 = vadd.f32 %v307, %v308
    %v310 = vrot.slane %v309, 2
    %v311 = vadd.f32 %v309, %v310
    %v312 = vrot.slane %v311, 1
    %v313 = vadd.f32 %v311, %v312
    %v314 = vrcp.pop %v247
    %v315 = vmul.f32 %v247, %v314
    %v316 = vsub.f32 1.0, %v315
    %v317 = vmul.f32 %v314, %v316
    %v318 = vadd.f32 %v314, %v317
    %vm319 = vweird.f32 %v247
    %vm320 = vweird.f32 %v314
    %vm321 = vmor %vm319, %vm320
    %v322 = vsel %vm321, %v314, %v318
    %v323 = vand.u32 2147483647, %v247
    %vm324 = vcmp.eq.f32.partialorder %v323, 8.507059e+37
    %v325 = vand.u32 %v247, 2147483648
    %v326 = vor.u32 1.1754944e-38, %v325
    %v327 = vsel %vm324, %v326, %v322
    %v328 = vrcp.pop %v254
    %v329 = vmul.f32 %v254, %v328
    %v330 = vsub.f32 1.0, %v329
    %v331 = vmul.f32 %v328, %v330
    %v332 = vadd.f32 %v328, %v331
    %vm333 = vweird.f32 %v254
    %vm334 = vweird.f32 %v328
    %vm335 = vmor %vm333, %vm334
    %v336 = vsel %vm335, %v328, %v332
    %v337 = vand.u32 2147483647, %v254
    %vm338 = vcmp.eq.f32.partialorder %v337, 8.507059e+37
    %v339 = vand.u32 %v254, 2147483648
    %v340 = vor.u32 1.1754944e-38, %v339
    %v341 = vsel %vm338, %v340, %v336
    %v342 = vrcp.pop %v261
    %v343 = vmul.f32 %v261, %v342
    %v344 = vsub.f32 1.0, %v343
    %v345 = vmul.f32 %v342, %v344
    %v346 = vadd.f32 %v342, %v345
    %vm347 = vweird.f32 %v261
    %vm348 = vweird.f32 %v342
    %vm349 = vmor %vm347, %vm348
    %v350 = vsel %vm349, %v342, %v346
    %v351 = vand.u32 2147483647, %v261
    %vm352 = vcmp.eq.f32.partialorder %v351, 8.507059e+37
    %v353 = vand.u32 %v261, 2147483648
    %v354 = vor.u32 1.1754944e-38, %v353
    %v355 = vsel %vm352, %v354, %v350
    %v356 = vrcp.pop %v268
    %v357 = vmul.f32 %v268, %v356
    %v358 = vsub.f32 1.0, %v357
    %v359 = vmul.f32 %v356, %v358
    %v360 = vadd.f32 %v356, %v359
    %vm361 = vweird.f32 %v268
    %vm362 = vweird.f32 %v356
    %vm363 = vmor %vm361, %vm362
    %v364 = vsel %vm363, %v356, %v360
    %v365 = vand.u32 2147483647, %v268
    %vm366 = vcmp.eq.f32.partialorder %v365, 8.507059e+37
    %v367 = vand.u32 %v268, 2147483648
    %v368 = vor.u32 1.1754944e-38, %v367
    %v369 = vsel %vm366, %v368, %v364
    %v370 = vmul.f32 %v292, %v327
    %v371 = vmul.f32 %v299, %v341
    %v372 = vmul.f32 %v306, %v355
    %v373 = vmul.f32 %v313, %v369
    %v374 = vlog2.pop %v247
    %v375 = vmul.f32 %v374, 0.6931472
    %v376 = vlog2.pop %v254
    %v377 = vmul.f32 %v376, 0.6931472
    %v378 = vlog2.pop %v261
    %v379 = vmul.f32 %v378, 0.6931472
    %v380 = vlog2.pop %v268
    %v381 = vmul.f32 %v380, 0.6931472
    %v382 = vsub.f32 %v164, %v375
    %v383 = vsub.f32 %v166, %v377
    %v384 = vsub.f32 %v168, %v379
    %v385 = vsub.f32 %v170, %v381
    %v386 = vadd.f32 %v370, %v382
    %v387 = vadd.f32 %v371, %v383
    %v388 = vadd.f32 %v372, %v384
    %v389 = vadd.f32 %v373, %v385
    %v390 = vld [vmem:[#allocation2] sm:$0xf]
    %v395 = vrot.slane %v387, 6
    %v396 = vrot.slane %v389, 6
    %vm397 = vcmask 1041408
    %v398 = vsel %vm397, %v386, %v395
    %v399 = vsel %vm397, %v388, %v396
    %vm400 = vcmask 1044484
    %v401 = vsel %vm400, %v398, %v398
    %vm402 = vcmask 1046534
    %v403 = vsel %vm402, %v398, %v401
    %v404 = vrot.slane %v399, 7
    %vm405 = vcmask 1041409
    %v406 = vsel %vm405, %v404, %v403
    %vm407 = vcmask 1043459
    %v408 = vsel %vm407, %v404, %v406
    %vm409 = vcmask 1045509
    %v410 = vsel %vm409, %v404, %v408
    %vm411 = vcmask 1047559
    %v412 = vsel %vm411, %v404, %v410
    %v414 = vadd.f32 %v390, %v412
    %415 = vst [vmem:[#allocation2] sm:$0xf] %v414
    // Predicated region
    $region22: #{tpu_custom_call.1} parent=1 // pred_check
      %p416 = pneg %p55
    $region23: #{tpu_custom_call.1} parent=1 // pred_check_branch
      %418 = sbr.rel (%p416) target = $region25
    $region24: #{tpu_custom_call.1} parent=1 // pred_region
      %v419 = vld [vmem:[#allocation2] sm:$0xf]
      %421 = vst [vmem:[#allocation1] ss:$4 sm:$0xff] %v419
      %v422 = vld.sshfl [vmem:[#allocation1] sm:$0xff pattern:$0x73625140]
      %v423 = vld.sshfl [vmem:[#allocation1 + $0x8] sm:$0xff pattern:$0x73625140]
      %v426 = vsel %vm397, %v422, 0.0
      %v427 = vsel %vm397, %v423, 0.0
      %v428 = vadd.f32 %v426, %v427
      %429 = vadd.xlane.f32.xlu0 %v428
      %v430 = vpop.xlane.xlu0 %429
      %vm431 = vcmask 1024
      %432 = vst.msk [vmem:[%s2] sm:$0x3] %vm431, %v430
    $region25: #{tpu_custom_call.1} parent=1 // pred_fallthru
      _
    // Predicated region
    $region26: #{tpu_custom_call.1} parent=1 // pred_check
      _
    $region27: #{tpu_custom_call.1} parent=1 // pred_check_branch
      %434 = sbr.rel (0) target = $region29
    $region28: #{tpu_custom_call.1} parent=1 // pred_region
      _
    $region29: #{tpu_custom_call.1} parent=1 // pred_fallthru
      _
    // Predicated region
    $region30: #{tpu_custom_call.1} parent=1 // pred_check
      _
    $region31: #{tpu_custom_call.1} parent=1 // pred_check_branch
      %436 = sbr.rel (0) target = $region33
    $region32: #{tpu_custom_call.1} parent=1 // pred_region
      _
    $region33: #{tpu_custom_call.1} parent=1 // pred_fallthru
      _
    %437 = vsyncpa [#allocation4], 1
    %438 = vsyncpa [#allocation6], 1

</llo_original>
